<compile_context>
chip_gen: v5e
topology: v5e:2x2
jax: 0.10.0
libtpu: 0.0.40
codegen_flags: <defaults>
</compile_context>

<pallas_src>
import jax
import jax.numpy as jnp
from jax.experimental import pallas as pl
from jax.experimental.pallas import tpu as pltpu


def _relu_kernel(x_ref, o_ref):
    # Elementwise ReLU on the current VMEM tile (pure VPU work).
    o_ref[...] = jnp.maximum(x_ref[...], jnp.zeros((), x_ref.dtype))


def _cdiv(a, b):
    return -(-a // b)


def _round_up(a, m):
    return _cdiv(a, m) * m


def _choose_lane(total, lane_cap):
    """Largest divisor of `total` usable as a lane-dense last dim (no padding).

    Prefers multiples of 128 (fully unmasked stores); otherwise the largest
    plain divisor >= 128 (full-array-dim exception to the 128 rule).
    """
    for lane in range((lane_cap // 128) * 128, 0, -128):
        if total % lane == 0:
            return lane
    for lane in range(min(lane_cap, total), 127, -1):
        if total % lane == 0:
            return lane
    return None


def relu_pallas(x, *, lane_cap=2048, block_bytes_cap=2 * 1024 * 1024,
                target_steps=8):
    """ReLU over an arbitrary-shaped tensor via a lane-dense Pallas kernel."""
    orig_shape = x.shape
    dtype = x.dtype

    total = 1
    for d in orig_shape:
        total *= int(d)
    if total == 0:
        return x

    itemsize = jnp.dtype(dtype).itemsize
    sublane = {4: 8, 2: 16, 1: 32}.get(itemsize, 8)

    lane = _choose_lane(total, lane_cap)
    if lane is not None:
        # Exact lane-dense 2D view of the flat buffer: no host-side pad/slice,
        # no extra HBM passes.  Ragged row tail handled by Pallas edge masking.
        rows = total // lane
        pad_tail = 0
        x2d = x.reshape(rows, lane)
    else:
        # Pathological fallback (e.g. prime element count): pad the flat
        # buffer to a lane-dense width and slice the tail off afterwards.
        # TODO(synk): fuse the pad into the pallas input (allow_input_fusion)
        # so this rare path also avoids the extra HBM pass.
        lane = 512
        rows = _cdiv(total, lane)
        pad_tail = rows * lane - total
        x2d = jnp.pad(x.reshape(-1), (0, pad_tail)).reshape(rows, lane)

    if rows <= 2 * sublane:
        # Tiny tensor: single full-extent block (rows == full dim satisfies
        # the (8,128) rule via the "equals full array dim" exception).
        tile_rows = rows
    else:
        row_bytes = lane * itemsize
        # VMEM cap per block (~2 MiB) -> 2 in + 2 out buffers stay well under
        # every chip's scoped-VMEM limit (incl. v5e's 16 MiB default).
        cap_rows = max(sublane,
                       (block_bytes_cap // row_bytes) // sublane * sublane)
        # Aim for >= target_steps grid steps so the pipeline actually
        # double-buffers and v7x can shard the axis across both TensorCores.
        tgt_rows = max(sublane, _round_up(_cdiv(rows, target_steps), sublane))
        tile_rows = min(cap_rows, tgt_rows, _round_up(rows, sublane))

    grid = (_cdiv(rows, tile_rows),)

    # NOTE: pipeline_mode=pl.Buffered(3) on the input spec is a possible <5%
    # extra win for short grids; omitted to keep the lowering maximally robust.
    out2d = pl.pallas_call(
        _relu_kernel,
        out_shape=jax.ShapeDtypeStruct((rows, lane), dtype),
        grid=grid,
        in_specs=[pl.BlockSpec((tile_rows, lane), lambda i: (i, 0))],
        out_specs=pl.BlockSpec((tile_rows, lane), lambda i: (i, 0)),
        input_output_aliases={0: 0},  # in-place semantics of the PyTorch op
        compiler_params=pltpu.CompilerParams(
            dimension_semantics=("parallel",),
            vmem_limit_bytes=32 * 1024 * 1024,
        ),
    )(x2d)

    out_flat = out2d.reshape(-1)
    if pad_tail:
        out_flat = out_flat[:total]
    return out_flat.reshape(orig_shape)


if __name__ == "__main__":
    key = jax.random.PRNGKey(0)
    # Small NCHW input consistent with the module's forward.
    x = jax.random.normal(key, (2, 4, 16, 16), dtype=jnp.float32)
    y = relu_pallas(x)
    jax.block_until_ready(y)
    assert y.shape == x.shape and y.dtype == x.dtype
    assert jnp.allclose(y, jnp.maximum(x, 0.0)), "mismatch vs reference ReLU"

    # The module's real activation shape (~0.92 MiB): exercises the exact
    # no-pad lane-dense layout (lane=1568) + multi-step ragged-tail grid (7,).
    x1 = jax.random.normal(jax.random.PRNGKey(1), (1, 1232, 14, 14),
                           dtype=jnp.float32)
    y1 = relu_pallas(x1)
    jax.block_until_ready(y1)
    assert jnp.allclose(y1, jnp.maximum(x1, 0.0)), "mismatch (module shape)"

    # Flat size with no multiple-of-128 divisor -> still no pad, exact reshape.
    x2 = jax.random.normal(jax.random.PRNGKey(2), (1, 12, 14, 14),
                           dtype=jnp.float32)
    y2 = relu_pallas(x2)
    jax.block_until_ready(y2)
    assert jnp.allclose(y2, jnp.maximum(x2, 0.0)), "mismatch (odd-size shape)"

    print("KERNEL_OK")
</pallas_src>

<mosaic_0001>
module attributes {stable_mosaic.version = 11 : i64} {
  func.func @_relu_kernel(%arg0: i32, %arg1: memref<1x2048xf32, #tpu.memory_space<vmem>>, %arg2: memref<1x2048xf32, #tpu.memory_space<vmem>>) attributes {dimension_semantics = [#tpu.dimension_semantics<parallel>], iteration_bounds = array<i64: 1>, scalar_prefetch = 0 : i64, scratch_operands = 0 : i64, tpu.core_type = #tpu.core_type<tc>, window_params = [{transform_indices = @transform_0, window_bounds = array<i64: 1, 2048>}, {transform_indices = @transform_1, window_bounds = array<i64: 1, 2048>}]} {
    %c0 = arith.constant 0 : index
    %c0_0 = arith.constant 0 : index
    %0 = vector.load %arg1[%c0, %c0_0] : memref<1x2048xf32, #tpu.memory_space<vmem>>, vector<1x2048xf32>
    %cst = arith.constant 0.000000e+00 : f32
    %1 = vector.broadcast %cst : f32 to vector<1x2048xf32>
    %2 = arith.maximumf %0, %1 : vector<1x2048xf32>
    %c0_1 = arith.constant 0 : index
    %c0_2 = arith.constant 0 : index
    %3 = vector.load %arg2[%c0_1, %c0_2] : memref<1x2048xf32, #tpu.memory_space<vmem>>, vector<1x2048xf32>
    tpu.vector_store %arg2[%c0_1, %c0_2], %2 {strides = array<i32>} : memref<1x2048xf32, #tpu.memory_space<vmem>>, vector<1x2048xf32>,
    return
  }
  func.func @transform_0(%arg0: i32) -> (i32, i32) {
    %c0_i32 = arith.constant 0 : i32
    %c0_i32_0 = arith.constant 0 : i32
    return %arg0, %c0_i32 : i32, i32
  }
  func.func @transform_1(%arg0: i32) -> (i32, i32) {
    %c0_i32 = arith.constant 0 : i32
    %c0_i32_0 = arith.constant 0 : i32
    return %arg0, %c0_i32 : i32, i32
  }
}

</mosaic_0001>

<llo_original>
// kernel: tpu_custom_call.1
$region0: #{tpu_custom_call.1}
  #allocation0 [shape = 'u32[]', space=smem, size = 0x4, offset = 0x4, fixed_abs, tag = 'smem constant byte address 0x4 - core index']
  #allocation1 [shape = 'u32[72,128]{1,0:T(1,128)}', space=vmem, size = 0x9000, scoped, tag = 'internal scratch']
  %s0 = inlined_call_operand.hbm [shape: f32[1,2048], index: 0, kind: input, shape index: {}, may-alias: {0,1}]
  %s1 = inlined_call_operand.hbm [shape: f32[1,2048], index: 1, kind: output, shape index: {}, may-alias: {0,1}]
  %s2 = sld [smem:[#allocation0]]
  $region18: #{tpu_custom_call.1} parent=0
    _
  %s4 = ssub.s32 1, %s2
  %s5 = scalar_select 0, %s4, %s2
  $region1: #{tpu_custom_call.1} parent=0
    #allocation2 [shape = 'u8[8192]{0}', space=vmem, size = 0x2000, scoped, tag = 'input window, operand 0, single buffered']
    #allocation3 [shape = 's32[1]{0}', space=sflag, size = 0x4, scoped, tag = 'scoped memory for tpu_custom_call.1']
    #allocation4 [shape = 's32[1]{0}', space=sflag, size = 0x4, scoped, tag = 'scoped memory for tpu_custom_call.1']
    #allocation5 [shape = 'u8[8192]{0}', space=vmem, size = 0x2000, scoped, tag = 'output window, operand 0, single buffered']
    %6 = vsyncpa [#allocation3], 0
    %7 = vsyncpa [#allocation4], 0
    // Predicated region
    $region2: #{tpu_custom_call.1} parent=1 // pred_check
      _
    $region3: #{tpu_custom_call.1} parent=1 // pred_check_branch
      %9 = sbr.rel (0) target = $region5
    $region4: #{tpu_custom_call.1} parent=1 // pred_region
      %11 = vsyncadd [#allocation3], 0
      %s13 = sshll.u32 %s0, 4
      %s14 = int_to_ptr.hbm [resolvable:$true] %s13
      %s15 = sshll.u32 [#allocation2], 4
      %s16 = int_to_ptr.vmem [resolvable:$true] %s15
      %18 = dma.hbm_to_vmem [thread:$0]  %s14, 256, %s16, [#allocation3]
    $region5: #{tpu_custom_call.1} parent=1 // pred_fallthru
      _
    // Predicated region
    $region6: #{tpu_custom_call.1} parent=1 // pred_check
      _
    $region7: #{tpu_custom_call.1} parent=1 // pred_check_branch
      %20 = sbr.rel (0) target = $region9
    $region8: #{tpu_custom_call.1} parent=1 // pred_region
      %22 = dma.done [#allocation3], 256
    $region9: #{tpu_custom_call.1} parent=1 // pred_fallthru
      _
    %v23 = vld [vmem:[#allocation2] sm:$0xff]
    %v24 = vld [vmem:[#allocation2 + $0x8] sm:$0xff]
    %v25 = vmax.f32 %v23, 0.0
    %v26 = vmax.f32 %v24, 0.0
    %27 = vst [vmem:[#allocation5] sm:$0xff] %v25
    %28 = vst [vmem:[#allocation5 + $0x8] sm:$0xff] %v26
    // Predicated region
    $region10: #{tpu_custom_call.1} parent=1 // pred_check
      _
    $region11: #{tpu_custom_call.1} parent=1 // pred_check_branch
      %30 = sbr.rel (0) target = $region13
    $region12: #{tpu_custom_call.1} parent=1 // pred_region
      %32 = vsyncadd [#allocation4], 0
      %s34 = sshll.u32 [#allocation5], 4
      %s35 = int_to_ptr.vmem [resolvable:$true] %s34
      %s36 = sshll.u32 %s1, 4
      %s37 = int_to_ptr.hbm [resolvable:$true] %s36
      %39 = dma.vmem_to_hbm [thread:$0]  %s35, 256, %s37, [#allocation4]
    $region13: #{tpu_custom_call.1} parent=1 // pred_fallthru
      _
    // Predicated region
    $region14: #{tpu_custom_call.1} parent=1 // pred_check
      _
    $region15: #{tpu_custom_call.1} parent=1 // pred_check_branch
      %41 = sbr.rel (0) target = $region17
    $region16: #{tpu_custom_call.1} parent=1 // pred_region
      %43 = dma.done [#allocation4], 256
    $region17: #{tpu_custom_call.1} parent=1 // pred_fallthru
      _
    %44 = vsyncpa [#allocation3], 1
    %45 = vsyncpa [#allocation4], 1

</llo_original>
